<compile_context>
chip_gen: v7x
topology: tpu7x:2x2x1
jax: 0.10.0
libtpu: 0.0.40
codegen_flags: <defaults>
</compile_context>

<pallas_src>
import functools

import jax
import jax.numpy as jnp
from jax.experimental import pallas as pl
from jax.experimental.pallas import tpu as pltpu

LANES = 128
SUBLANES = 8


# ----------------------------------------------------------------------------
# Pass 1: per-split partial min/max, accumulated elementwise into (8,128)
# vreg-shaped output blocks (resident across the "arbitrary" reduction axis).
# ----------------------------------------------------------------------------
def _minmax_kernel(x_ref, mn_ref, mx_ref):
    i = pl.program_id(1)
    x = x_ref[...].astype(jnp.float32)                    # cast in VMEM
    xr = x.reshape(-1, SUBLANES, LANES)                   # fold to vreg stack
    tile_min = jnp.min(xr, axis=0)[None]                  # (1,8,128) VPU fold
    tile_max = jnp.max(xr, axis=0)[None]

    @pl.when(i == 0)
    def _():
        mn_ref[...] = tile_min
        mx_ref[...] = tile_max

    @pl.when(i > 0)
    def _():
        mn_ref[...] = jnp.minimum(mn_ref[...], tile_min)
        mx_ref[...] = jnp.maximum(mx_ref[...], tile_max)


# ----------------------------------------------------------------------------
# Pass 2: elementwise rescale.  scale/offset (branch + divide already folded
# outside the kernel) are read from SMEM; per element: one mul + one add.
# ----------------------------------------------------------------------------
def _rescale_kernel(so_ref, x_ref, o_ref):
    scale = so_ref[0]
    offset = so_ref[1]
    x = x_ref[...].astype(jnp.float32)
    o_ref[...] = (x * scale + offset).astype(o_ref.dtype)


def color_rescale(img, min_val=0.0, max_val=1.0, *, tile_rows=1024, num_splits=2):
    """Pallas implementation of ColorRescale.forward for an arbitrary-shape image."""
    lo = float(min_val)
    hi = float(max_val)
    orig_shape = img.shape
    orig_dtype = img.dtype
    out_dtype = orig_dtype if jnp.issubdtype(orig_dtype, jnp.floating) else jnp.float32

    total = img.size
    flat = img.reshape(-1)

    # ---- lane-dense layout + neutral padding (first element) ----------------
    rows = pl.cdiv(total, LANES)
    tile = max(SUBLANES, min(int(tile_rows), rows))
    tile = ((tile + SUBLANES - 1) // SUBLANES) * SUBLANES          # sublane mult
    tiles = pl.cdiv(rows, tile)
    num_splits = max(1, min(int(num_splits), tiles))               # no waste on small inputs
    tiles = ((tiles + num_splits - 1) // num_splits) * num_splits  # even split
    tiles_per_split = tiles // num_splits
    padded_rows = tiles * tile
    pad = padded_rows * LANES - total
    if pad:
        # First element is neutral for min/max and harmless for the rescale.
        flat = jnp.concatenate([flat, jnp.broadcast_to(flat[:1], (pad,))])
    x2d = flat.reshape(padded_rows, LANES)

    # ---- Pass 1: global min / max -------------------------------------------
    mn_part, mx_part = pl.pallas_call(
        _minmax_kernel,
        out_shape=(
            jax.ShapeDtypeStruct((num_splits, SUBLANES, LANES), jnp.float32),
            jax.ShapeDtypeStruct((num_splits, SUBLANES, LANES), jnp.float32),
        ),
        grid_spec=pltpu.PrefetchScalarGridSpec(
            num_scalar_prefetch=0,
            grid=(num_splits, tiles_per_split),
            in_specs=[
                pl.BlockSpec((tile, LANES),
                             lambda c, i: (c * tiles_per_split + i, 0)),
            ],
            out_specs=(
                pl.BlockSpec((1, SUBLANES, LANES), lambda c, i: (c, 0, 0)),
                pl.BlockSpec((1, SUBLANES, LANES), lambda c, i: (c, 0, 0)),
            ),
        ),
        compiler_params=pltpu.CompilerParams(
            dimension_semantics=("parallel", "arbitrary")),
    )(x2d)

    # Tiny final reduction (num_splits*8*128 elements) + branch folding by XLA.
    g_mn = jnp.min(mn_part)
    g_mx = jnp.max(mx_part)
    rng = g_mx - g_mn
    nonzero = rng != 0.0
    safe_rng = jnp.where(nonzero, rng, 1.0)                # avoid 0/0
    scale = jnp.where(nonzero, (hi - lo) / safe_rng, 0.0)
    offset = jnp.where(nonzero, lo - g_mn * scale, (hi - lo) * 0.5)
    so = jnp.stack([scale, offset]).astype(jnp.float32)    # (2,) -> SMEM scalars

    # ---- Pass 2: elementwise rescale -----------------------------------------
    out2d = pl.pallas_call(
        _rescale_kernel,
        out_shape=jax.ShapeDtypeStruct((padded_rows, LANES), out_dtype),
        grid_spec=pltpu.PrefetchScalarGridSpec(
            num_scalar_prefetch=0,
            grid=(tiles,),
            in_specs=[
                pl.BlockSpec(memory_space=pltpu.MemorySpace.SMEM),   # (2,) scale/offset
                pl.BlockSpec((tile, LANES), lambda i: (i, 0)),
            ],
            out_specs=pl.BlockSpec((tile, LANES), lambda i: (i, 0)),
        ),
        compiler_params=pltpu.CompilerParams(
            dimension_semantics=("parallel",)),
    )(so, x2d)

    return out2d.reshape(-1)[:total].reshape(orig_shape)


if __name__ == "__main__":
    key = jax.random.PRNGKey(0)
    # NCHW image, batch=2, channels=4, spatial=16
    x = jax.random.normal(key, (2, 4, 16, 16), dtype=jnp.float32) * 3.0 + 0.5

    lo, hi = 0.0, 1.0
    out = jax.block_until_ready(color_rescale(x, lo, hi))

    # Reference (pure JAX, same semantics as the PyTorch module).
    rng = x.max() - x.min()
    ref = jnp.where(rng != 0,
                    (x - x.min()) / rng * (hi - lo) + lo,
                    x * 0 + (hi - lo) / 2)
    assert out.shape == x.shape and out.dtype == x.dtype
    assert jnp.allclose(out, ref, atol=1e-5, rtol=1e-5)

    # Degenerate (constant) image exercises the zero-range branch.
    xc = jnp.full((2, 4, 16, 16), 3.25, dtype=jnp.float32)
    outc = jax.block_until_ready(color_rescale(xc, lo, hi))
    assert jnp.allclose(outc, jnp.full_like(xc, (hi - lo) / 2), atol=1e-6)

    # Odd shape (not a multiple of 128) exercises the neutral-padded tail.
    xo = jax.random.normal(jax.random.PRNGKey(1), (1, 3, 7, 11), dtype=jnp.float32)
    outo = jax.block_until_ready(color_rescale(xo, lo, hi))
    rngo = xo.max() - xo.min()
    refo = (xo - xo.min()) / rngo * (hi - lo) + lo
    assert jnp.allclose(outo, refo, atol=1e-5, rtol=1e-5)

    # Non-default range + bf16 input exercise the scale/offset fold and cast path.
    xb = (jax.random.normal(jax.random.PRNGKey(2), (2, 4, 16, 16)) * 2.0).astype(jnp.bfloat16)
    outb = jax.block_until_ready(color_rescale(xb, -1.0, 1.0))
    assert outb.dtype == xb.dtype and outb.shape == xb.shape

    # TODO(synk): forward-only; the rng==0 masking is not VJP-safe (matches the
    # original module's forward semantics only).
    print("KERNEL_OK")
</pallas_src>

<mosaic_0001>
module attributes {stable_mosaic.version = 11 : i64} {
  func.func @_minmax_kernel(%arg0: i32, %arg1: i32, %arg2: memref<16x128xf32, #tpu.memory_space<vmem>>, %arg3: memref<1x8x128xf32, #tpu.memory_space<vmem>>, %arg4: memref<1x8x128xf32, #tpu.memory_space<vmem>>) attributes {dimension_semantics = [#tpu.dimension_semantics<parallel>, #tpu.dimension_semantics<arbitrary>], iteration_bounds = array<i64: 1, 1>, scalar_prefetch = 0 : i64, scratch_operands = 0 : i64, tpu.core_type = #tpu.core_type<tc>, window_params = [{transform_indices = @transform_0, window_bounds = array<i64: 16, 128>}, {transform_indices = @transform_1, window_bounds = array<i64: 1, 8, 128>}, {transform_indices = @transform_2, window_bounds = array<i64: 1, 8, 128>}]} {
    %c0 = arith.constant 0 : index
    %c0_0 = arith.constant 0 : index
    %0 = vector.load %arg2[%c0, %c0_0] : memref<16x128xf32, #tpu.memory_space<vmem>>, vector<16x128xf32>
    %1 = vector.shape_cast %0 : vector<16x128xf32> to vector<2x8x128xf32>
    %cst = arith.constant dense<0x7F800000> : vector<8x128xf32>
    %2 = vector.multi_reduction <minimumf>, %1, %cst [0] : vector<2x8x128xf32> to vector<8x128xf32>
    %3 = vector.shape_cast %2 : vector<8x128xf32> to vector<1x8x128xf32>
    %cst_1 = arith.constant dense<0xFF800000> : vector<8x128xf32>
    %4 = vector.multi_reduction <maximumf>, %1, %cst_1 [0] : vector<2x8x128xf32> to vector<8x128xf32>
    %5 = vector.shape_cast %4 : vector<8x128xf32> to vector<1x8x128xf32>
    %c0_i32 = arith.constant 0 : i32
    %6 = arith.cmpi eq, %arg1, %c0_i32 : i32
    %7 = arith.extui %6 : i1 to i32
    %c0_i32_2 = arith.constant 0 : i32
    %8 = arith.cmpi ne, %7, %c0_i32_2 : i32
    scf.if %8 {
      %c0_5 = arith.constant 0 : index
      %c0_6 = arith.constant 0 : index
      %c0_7 = arith.constant 0 : index
      %12 = vector.load %arg3[%c0_5, %c0_6, %c0_7] : memref<1x8x128xf32, #tpu.memory_space<vmem>>, vector<1x8x128xf32>
      tpu.vector_store %arg3[%c0_5, %c0_6, %c0_7], %3 {strides = array<i32>} : memref<1x8x128xf32, #tpu.memory_space<vmem>>, vector<1x8x128xf32>,
      %c0_8 = arith.constant 0 : index
      %c0_9 = arith.constant 0 : index
      %c0_10 = arith.constant 0 : index
      %13 = vector.load %arg4[%c0_8, %c0_9, %c0_10] : memref<1x8x128xf32, #tpu.memory_space<vmem>>, vector<1x8x128xf32>
      tpu.vector_store %arg4[%c0_8, %c0_9, %c0_10], %5 {strides = array<i32>} : memref<1x8x128xf32, #tpu.memory_space<vmem>>, vector<1x8x128xf32>,
    } else {
    }
    %c0_i32_3 = arith.constant 0 : i32
    %9 = arith.cmpi sgt, %arg1, %c0_i32_3 : i32
    %10 = arith.extui %9 : i1 to i32
    %c0_i32_4 = arith.constant 0 : i32
    %11 = arith.cmpi ne, %10, %c0_i32_4 : i32
    scf.if %11 {
      %c0_5 = arith.constant 0 : index
      %c0_6 = arith.constant 0 : index
      %c0_7 = arith.constant 0 : index
      %12 = vector.load %arg3[%c0_5, %c0_6, %c0_7] : memref<1x8x128xf32, #tpu.memory_space<vmem>>, vector<1x8x128xf32>
      %13 = arith.minimumf %12, %3 : vector<1x8x128xf32>
      %c0_8 = arith.constant 0 : index
      %c0_9 = arith.constant 0 : index
      %c0_10 = arith.constant 0 : index
      %14 = vector.load %arg3[%c0_8, %c0_9, %c0_10] : memref<1x8x128xf32, #tpu.memory_space<vmem>>, vector<1x8x128xf32>
      tpu.vector_store %arg3[%c0_8, %c0_9, %c0_10], %13 {strides = array<i32>} : memref<1x8x128xf32, #tpu.memory_space<vmem>>, vector<1x8x128xf32>,
      %c0_11 = arith.constant 0 : index
      %c0_12 = arith.constant 0 : index
      %c0_13 = arith.constant 0 : index
      %15 = vector.load %arg4[%c0_11, %c0_12, %c0_13] : memref<1x8x128xf32, #tpu.memory_space<vmem>>, vector<1x8x128xf32>
      %16 = arith.maximumf %15, %5 : vector<1x8x128xf32>
      %c0_14 = arith.constant 0 : index
      %c0_15 = arith.constant 0 : index
      %c0_16 = arith.constant 0 : index
      %17 = vector.load %arg4[%c0_14, %c0_15, %c0_16] : memref<1x8x128xf32, #tpu.memory_space<vmem>>, vector<1x8x128xf32>
      tpu.vector_store %arg4[%c0_14, %c0_15, %c0_16], %16 {strides = array<i32>} : memref<1x8x128xf32, #tpu.memory_space<vmem>>, vector<1x8x128xf32>,
    } else {
    }
    return
  }
  func.func @transform_0(%arg0: i32, %arg1: i32) -> (i32, i32) {
    %c1_i32 = arith.constant 1 : i32
    %0 = arith.muli %arg0, %c1_i32 : i32
    %1 = arith.addi %0, %arg1 : i32
    %c0_i32 = arith.constant 0 : i32
    %c0_i32_0 = arith.constant 0 : i32
    return %1, %c0_i32 : i32, i32
  }
  func.func @transform_1(%arg0: i32, %arg1: i32) -> (i32, i32, i32) {
    %c0_i32 = arith.constant 0 : i32
    %c0_i32_0 = arith.constant 0 : i32
    %c0_i32_1 = arith.constant 0 : i32
    return %arg0, %c0_i32, %c0_i32_0 : i32, i32, i32
  }
  func.func @transform_2(%arg0: i32, %arg1: i32) -> (i32, i32, i32) {
    %c0_i32 = arith.constant 0 : i32
    %c0_i32_0 = arith.constant 0 : i32
    %c0_i32_1 = arith.constant 0 : i32
    return %arg0, %c0_i32, %c0_i32_0 : i32, i32, i32
  }
}

</mosaic_0001>

<llo_original>
// kernel: tpu_custom_call.1
$region0: #{tpu_custom_call.1}
  #allocation0 [shape = 'u32[]', space=smem, size = 0x4, offset = 0x4, fixed_abs, tag = 'smem constant byte address 0x4 - core index']
  #allocation1 [shape = 'u32[144,128]{1,0:T(1,128)}', space=vmem, size = 0x12000, scoped, tag = 'internal scratch']
  %s0 = inlined_call_operand.hbm [shape: f32[16,128], index: 0, kind: input, shape index: {}]
  %s1 = inlined_call_operand.hbm [shape: f32[1,8,128], index: 1, kind: output, shape index: {0}]
  %s2 = inlined_call_operand.hbm [shape: f32[1,8,128], index: 2, kind: output, shape index: {1}]
  %3 = xla_tuple %s1, %s2
  %s4 = sld [smem:[#allocation0]]
  $region34: #{tpu_custom_call.1} parent=0
    _
  %s6 = ssub.s32 1, %s4
  %s7 = scalar_select 0, %s6, %s4
  $region1: #{tpu_custom_call.1} parent=0
    #allocation2 [shape = 'u8[8192]{0}', space=vmem, size = 0x2000, scoped, tag = 'input window, operand 0, single buffered']
    #allocation3 [shape = 's32[1]{0}', space=sflag, size = 0x4, scoped, tag = 'scoped memory for tpu_custom_call.1']
    #allocation4 [shape = 's32[1]{0}', space=sflag, size = 0x4, scoped, tag = 'scoped memory for tpu_custom_call.1']
    #allocation5 [shape = 'u8[4096]{0}', space=vmem, size = 0x1000, scoped, tag = 'output window, operand 0, single buffered']
    #allocation6 [shape = 'u8[4096]{0}', space=vmem, size = 0x1000, scoped, tag = 'output window, operand 1, single buffered']
    #allocation7 [shape = 's32[1]{0}', space=sflag, size = 0x4, scoped, tag = 'scoped memory for tpu_custom_call.1']
    %8 = vsyncpa [#allocation3], 0
    %9 = vsyncpa [#allocation4], 0
    %10 = vsyncpa [#allocation7], 0
    // Predicated region
    $region2: #{tpu_custom_call.1} parent=1 // pred_check
      _
    $region3: #{tpu_custom_call.1} parent=1 // pred_check_branch
      %12 = sbr.rel (0) target = $region5
    $region4: #{tpu_custom_call.1} parent=1 // pred_region
      %s13 = sadd.s32 0, 0
      %s14 = smul.u32 2, %s13
      %s16 = ssub.s32 256, 256
      %17 = vsyncadd [#allocation3], %s16
      %s18 = smul.addr %s14, 128
      %s19 = scalar_lea.hbm %s0, %s18
      %s20 = sshll.u32 [#allocation2], 4
      %s21 = int_to_ptr.vmem [resolvable:$true] %s20
      %26 = dma.hbm_to_vmem [thread:$0]  %s19, 256, %s21, [#allocation3], 128, 128, 8
    $region5: #{tpu_custom_call.1} parent=1 // pred_fallthru
      _
    // Predicated region
    $region6: #{tpu_custom_call.1} parent=1 // pred_check
      _
    $region7: #{tpu_custom_call.1} parent=1 // pred_check_branch
      %28 = sbr.rel (0) target = $region9
    $region8: #{tpu_custom_call.1} parent=1 // pred_region
      %29 = dma.done [#allocation3], 256
    $region9: #{tpu_custom_call.1} parent=1 // pred_fallthru
      _
    %s30 = sadd.s32 0, 0
    %s31 = smul.u32 2, %s30
    %v32 = vld [vmem:[#allocation2] sm:$0xff]
    %v33 = vld [vmem:[#allocation2 + $0x8] sm:$0xff]
    %v34 = vmin.f32 %v32, %v33
    %v35 = vmax.f32 %v32, %v33
    %p36 = scmp.eq.s32.totalorder 0, 0
    // Predicated region
    $region10: #{tpu_custom_call.1} parent=1 // pred_check
      %p37 = pneg %p36
    $region11: #{tpu_custom_call.1} parent=1 // pred_check_branch
      %39 = sbr.rel (%p37) target = $region13
    $region12: #{tpu_custom_call.1} parent=1 // pred_region
      %40 = vst [vmem:[#allocation5] sm:$0xff] %v34
      %41 = vst [vmem:[#allocation6] sm:$0xff] %v35
    $region13: #{tpu_custom_call.1} parent=1 // pred_fallthru
      _
    %p42 = scmp.gt.s32.totalorder 0, 0
    // Predicated region
    $region14: #{tpu_custom_call.1} parent=1 // pred_check
      %p43 = pneg %p42
    $region15: #{tpu_custom_call.1} parent=1 // pred_check_branch
      %45 = sbr.rel (%p43) target = $region17
    $region16: #{tpu_custom_call.1} parent=1 // pred_region
      %v46 = vld [vmem:[#allocation5] sm:$0xff]
      %v47 = vmin.f32 %v46, %v34
      %48 = vst [vmem:[#allocation5] sm:$0xff] %v47
      %v49 = vld [vmem:[#allocation6] sm:$0xff]
      %v50 = vmax.f32 %v49, %v35
      %51 = vst [vmem:[#allocation6] sm:$0xff] %v50
    $region17: #{tpu_custom_call.1} parent=1 // pred_fallthru
      _
    // Predicated region
    $region18: #{tpu_custom_call.1} parent=1 // pred_check
      _
    $region19: #{tpu_custom_call.1} parent=1 // pred_check_branch
      %53 = sbr.rel (0) target = $region21
    $region20: #{tpu_custom_call.1} parent=1 // pred_region
      %s55 = ssub.s32 128, 128
      %56 = vsyncadd [#allocation4], %s55
      %s58 = sshll.u32 [#allocation5], 4
      %s59 = int_to_ptr.vmem [resolvable:$true] %s58
      %61 = dma.vmem_to_hbm [thread:$0]  %s59, 128, %s1, [#allocation4]
    $region21: #{tpu_custom_call.1} parent=1 // pred_fallthru
      _
    // Predicated region
    $region22: #{tpu_custom_call.1} parent=1 // pred_check
      _
    $region23: #{tpu_custom_call.1} parent=1 // pred_check_branch
      %63 = sbr.rel (0) target = $region25
    $region24: #{tpu_custom_call.1} parent=1 // pred_region
      %s65 = ssub.s32 128, 128
      %66 = vsyncadd [#allocation7], %s65
      %s68 = sshll.u32 [#allocation6], 4
      %s69 = int_to_ptr.vmem [resolvable:$true] %s68
      %71 = dma.vmem_to_hbm [thread:$0]  %s69, 128, %s2, [#allocation7]
    $region25: #{tpu_custom_call.1} parent=1 // pred_fallthru
      _
    // Predicated region
    $region26: #{tpu_custom_call.1} parent=1 // pred_check
      _
    $region27: #{tpu_custom_call.1} parent=1 // pred_check_branch
      %73 = sbr.rel (0) target = $region29
    $region28: #{tpu_custom_call.1} parent=1 // pred_region
      %74 = dma.done [#allocation4], 128
    $region29: #{tpu_custom_call.1} parent=1 // pred_fallthru
      _
    // Predicated region
    $region30: #{tpu_custom_call.1} parent=1 // pred_check
      _
    $region31: #{tpu_custom_call.1} parent=1 // pred_check_branch
      %76 = sbr.rel (0) target = $region33
    $region32: #{tpu_custom_call.1} parent=1 // pred_region
      %77 = dma.done [#allocation7], 128
    $region33: #{tpu_custom_call.1} parent=1 // pred_fallthru
      _
    %78 = vsyncpa [#allocation3], 1
    %79 = vsyncpa [#allocation4], 1
    %80 = vsyncpa [#allocation7], 1

</llo_original>
